<compile_context>
chip_gen: v5e
topology: v5e:2x2
jax: 0.10.0
libtpu: 0.0.40
codegen_flags: <defaults>
</compile_context>

<pallas_src>
import functools

import jax
import jax.numpy as jnp
from jax.experimental import pallas as pl
from jax.experimental.pallas import tpu as pltpu


# Pair-axis alignment: 32 sublanes (native int8 tile) x 128 lanes, so every
# streamed block — including the int8 offsets — is a whole number of native tiles.
_PAIR_ALIGN = 32 * 128


def _round_up(x, m):
    return ((x + m - 1) // m) * m


def _repulsive_prior_kernel(cell_ref, nbr_pos_ref, ctr_pos_ref, off_ref,
                            out_ref, acc_ref, *, r_min, r_max):
    """One (TR*128)-pair tile of one (batch, chunk) per grid step.

    cell_ref    : (B, 9)           f32 SMEM  row-major cell matrix per batch (resident)
    nbr_pos_ref : (1, 3, TR, 128)  f32 VMEM  neighbor positions r_j (dense planes)
    ctr_pos_ref : (1, 3, TR, 128)  f32 VMEM  center   positions r_i
    off_ref     : (1, 3, TR, 128)  i8  VMEM  integer periodic-image shifts
    out_ref     : (1, 1, 8, 128)   f32 VMEM  per-(batch, chunk) partial sum (broadcast)
    acc_ref     : (TR, 128)        f32 VMEM  running per-pair 1/d^2 accumulator
    """
    b = pl.program_id(0)
    j = pl.program_id(2)

    @pl.when(j == 0)
    def _init():
        acc_ref[...] = jnp.zeros_like(acc_ref)

    # int8 cell shifts -> one full-density (TR,128) f32 plane per component.
    off = [off_ref[0, d].astype(jnp.float32) for d in range(3)]

    # d^2 = sum_e ( r_j[e] + (offsets @ cell)[e] - r_i[e] )^2, fused over dense planes.
    # The shift uses 9 SMEM scalars broadcast over the planes (VPU); no MXU needed.
    d2 = jnp.zeros(acc_ref.shape, jnp.float32)
    for e in range(3):
        shift_e = (cell_ref[b, 0 * 3 + e] * off[0]
                   + cell_ref[b, 1 * 3 + e] * off[1]
                   + cell_ref[b, 2 * 3 + e] * off[2])
        dv = nbr_pos_ref[0, e] + shift_e - ctr_pos_ref[0, e]
        d2 = d2 + dv * dv

    # Window on d^2 (monotone in d; may differ from the sqrt reference by 1 ulp
    # exactly at r_min / r_max).  Masked & padded slots have d2 == 0 < r_min^2.
    keep = (d2 >= r_min * r_min) & (d2 <= r_max * r_max)
    inv = pl.reciprocal(jnp.where(keep, d2, 1.0), approx=False)   # EUP slot; VALU stays free
    acc_ref[...] += jnp.where(keep, inv, 0.0)

    @pl.when(j == pl.num_programs(2) - 1)
    def _finalize():
        total = 0.5 * jnp.sum(acc_ref[...])
        out_ref[...] = jnp.broadcast_to(total, out_ref.shape)     # dense (8,128) store


def repulsive_prior(positions, cell, neighbors, offsets, mask,
                    r_min=0.1, r_max=2.0, pair_tile=32768,
                    integral_offsets=True):
    """Pallas TPU implementation of RepulsivePrior.forward.

    positions (B,N,3) f32, cell (B,3,3) f32, neighbors (B,N,K) int,
    offsets (B,N,K,3) integer cell shifts, mask (B,N,K) -> out (B,) f32.
    """
    B, N, _ = positions.shape
    K = neighbors.shape[-1]
    M = N * K

    positions = positions.astype(jnp.float32)
    cell = cell.astype(jnp.float32)

    # ---- wrapper glue: gather / mask-fold / layout only (no windowed arithmetic) ----
    nbr = jnp.clip(neighbors.reshape(B, M).astype(jnp.int32), 0, N - 1)
    valid = (mask.reshape(B, M) != 0)[..., None]                         # (B, M, 1)

    nbr_pos = jnp.take_along_axis(positions, nbr[..., None], axis=1)     # (B, M, 3)  r_j
    ctr_pos = jnp.repeat(positions, K, axis=1)                           # (B, M, 3)  r_i
    off = offsets.reshape(B, M, 3).astype(jnp.float32)

    # Fold validity into the data: masked slot -> r_j := r_i, shift := 0, so
    # d = 0 < r_min and the pair contributes exactly 0 (matches the reference).
    nbr_pos = jnp.where(valid, nbr_pos, ctr_pos)
    off = jnp.where(valid, off, 0.0)
    if integral_offsets:
        # schnetpack convention: offsets are small integer periodic-image shifts;
        # int8 keeps that stream at 3 B/pair (biggest win on v5e's ~0.8 TB/s HBM).
        # Set integral_offsets=False for fractional / out-of-range offsets.
        off = jnp.rint(off).astype(jnp.int8)

    # ---- tiling: fat, full-sublane-density pair tiles ------------------------------
    m1 = _round_up(max(M, 1), _PAIR_ALIGN)
    tm = _round_up(min(pair_tile, m1), _PAIR_ALIGN)
    n_tiles = -(-m1 // tm)

    # v7x megacore guard: make the number of parallel grid cells (B * n_chunks)
    # even so both TensorCores get work even for B == 1 / odd B.
    n_chunks = 1
    if B % 2 == 1:
        if n_tiles >= 2:
            n_chunks = 2
        elif m1 >= 2 * _PAIR_ALIGN:
            tm = _round_up(m1 // 2, _PAIR_ALIGN)
            n_tiles = -(-m1 // tm)
            n_chunks = 2
    n_tiles = _round_up(n_tiles, n_chunks)
    n_j = n_tiles // n_chunks
    m_pad = n_tiles * tm
    tr = tm // 128
    r_pad = m_pad // 128

    def to_dense(x):   # (B, M, 3) -> (B, 3, r_pad, 128), zero padded along the pair axis
        x = jnp.moveaxis(x, -1, 1)
        x = jnp.pad(x, ((0, 0), (0, 0), (0, m_pad - M)))
        return x.reshape(B, 3, r_pad, 128)

    nbr_pos = to_dense(nbr_pos)
    ctr_pos = to_dense(ctr_pos)
    off = to_dense(off)
    cell_flat = cell.reshape(B, 9)

    grid = (B, n_chunks, n_j)
    stream_map = lambda b, c, j: (b, 0, c * n_j + j, 0)

    kernel = functools.partial(_repulsive_prior_kernel,
                               r_min=float(r_min), r_max=float(r_max))

    # VMEM budget derived from the real tile working set (double-buffered streams
    # + accumulator + output block + slack), clamped to fit v7x's 64 MiB physical.
    off_bytes = 1 if integral_offsets else 4
    tile_stream_bytes = 3 * tm * (4 + 4 + off_bytes)
    vmem_limit = int(max(8 << 20,
                         min(32 << 20, 2 * tile_stream_bytes + 4 * tm + (4 << 20))))

    flops = B * m_pad * 32
    bytes_accessed = (B * 3 * m_pad * (4 + 4 + off_bytes)
                      + B * 9 * 4 + B * n_chunks * 8 * 128 * 4)

    # TODO(synk): for very small N (<~32) on v5e, regenerating r_i in-kernel instead
    # of streaming ctr_pos would cut ~40% of stream bytes; not done here.
    out = pl.pallas_call(
        kernel,
        out_shape=jax.ShapeDtypeStruct((B, n_chunks, 8, 128), jnp.float32),
        grid_spec=pltpu.PrefetchScalarGridSpec(
            num_scalar_prefetch=0,
            grid=grid,
            in_specs=[
                pl.BlockSpec(memory_space=pltpu.MemorySpace.SMEM),   # cell (B,9), resident
                pl.BlockSpec((1, 3, tr, 128), stream_map),           # neighbor positions r_j
                pl.BlockSpec((1, 3, tr, 128), stream_map),           # center positions   r_i
                pl.BlockSpec((1, 3, tr, 128), stream_map),           # int8 cell shifts
            ],
            out_specs=pl.BlockSpec((1, 1, 8, 128), lambda b, c, j: (b, c, 0, 0)),
            scratch_shapes=[pltpu.VMEM((tr, 128), jnp.float32)],     # per-(b,c) accumulator
        ),
        compiler_params=pltpu.CompilerParams(
            dimension_semantics=("parallel", "parallel", "arbitrary"),
            vmem_limit_bytes=vmem_limit,
        ),
        cost_estimate=pl.CostEstimate(
            flops=flops, transcendentals=B * m_pad, bytes_accessed=bytes_accessed),
    )(cell_flat, nbr_pos, ctr_pos, off)

    # Partial sums per (batch, chunk) -> (B,)
    return out[:, :, 0, 0].sum(axis=1)


def reference_repulsive_prior(positions, cell, neighbors, offsets, mask,
                              r_min=0.1, r_max=2.0):
    """Pure-JAX reference matching the PyTorch atom_distances + RepulsivePrior."""
    gathered = jax.vmap(lambda p, n: p[n])(positions, neighbors)       # (B,N,K,3)
    off_cart = jnp.einsum('bnkd,bde->bnke', offsets, cell)
    dist_vec = gathered - positions[:, :, None, :] + off_cart
    d = jnp.sqrt(jnp.sum(dist_vec * dist_vec, axis=-1))
    d = jnp.where(mask != 0.0, d, 0.0)
    keep = (d >= r_min) & (d <= r_max)
    f = jnp.where(keep, 1.0 / jnp.where(keep, d * d, 1.0), 0.0)
    return 0.5 * jnp.sum(f, axis=(1, 2))


if __name__ == "__main__":
    # Small deterministic inputs consistent with the module's forward:
    # B molecules, N atoms, K neighbor slots per atom.
    B, N, K = 2, 8, 8
    key = jax.random.PRNGKey(0)
    kp, kn, ko, km = jax.random.split(key, 4)

    positions = jax.random.uniform(kp, (B, N, 3), jnp.float32, 0.0, 2.0)
    cell = jnp.broadcast_to(3.0 * jnp.eye(3, dtype=jnp.float32), (B, 3, 3))
    neighbors = jax.random.randint(kn, (B, N, K), 0, N).astype(jnp.int32)
    offsets = jax.random.randint(ko, (B, N, K, 3), -1, 2).astype(jnp.float32)
    mask = (jax.random.uniform(km, (B, N, K)) > 0.2).astype(jnp.float32)

    out = repulsive_prior(positions, cell, neighbors, offsets, mask)
    out = jax.block_until_ready(out)

    ref = reference_repulsive_prior(positions, cell, neighbors, offsets, mask)
    assert out.shape == (B,), out.shape
    assert jnp.allclose(out, ref, rtol=1e-4, atol=1e-4), (out, ref)
    print("KERNEL_OK")
</pallas_src>

<mosaic_0001>
module attributes {stable_mosaic.version = 11 : i64} {
  func.func @_repulsive_prior_kernel(%arg0: i32, %arg1: i32, %arg2: i32, %arg3: memref<2x9xf32, #tpu.memory_space<smem>>, %arg4: memref<1x3x32x128xf32, #tpu.memory_space<vmem>>, %arg5: memref<1x3x32x128xf32, #tpu.memory_space<vmem>>, %arg6: memref<1x3x32x128xi8, #tpu.memory_space<vmem>>, %arg7: memref<1x1x8x128xf32, #tpu.memory_space<vmem>>, %arg8: memref<32x128xf32, #tpu.memory_space<vmem>>) attributes {dimension_semantics = [#tpu.dimension_semantics<parallel>, #tpu.dimension_semantics<parallel>, #tpu.dimension_semantics<arbitrary>], iteration_bounds = array<i64: 2, 1, 1>, scalar_prefetch = 0 : i64, scratch_operands = 1 : i64, tpu.core_type = #tpu.core_type<tc>, window_params = [{transform_indices = @transform_0, window_bounds = array<i64: 2, 9>}, {transform_indices = @transform_1, window_bounds = array<i64: 1, 3, 32, 128>}, {transform_indices = @transform_2, window_bounds = array<i64: 1, 3, 32, 128>}, {transform_indices = @transform_3, window_bounds = array<i64: 1, 3, 32, 128>}, {transform_indices = @transform_4, window_bounds = array<i64: 1, 1, 8, 128>}]} {
    %c0_i32 = arith.constant 0 : i32
    %0 = arith.cmpi eq, %arg2, %c0_i32 : i32
    %1 = arith.extui %0 : i1 to i32
    %c0_i32_0 = arith.constant 0 : i32
    %2 = arith.cmpi ne, %1, %c0_i32_0 : i32
    scf.if %2 {
      %cst_47 = arith.constant 0.000000e+00 : f32
      %95 = vector.broadcast %cst_47 : f32 to vector<32x128xf32>
      %c0_48 = arith.constant 0 : index
      %c0_49 = arith.constant 0 : index
      %96 = vector.load %arg8[%c0_48, %c0_49] : memref<32x128xf32, #tpu.memory_space<vmem>>, vector<32x128xf32>
      tpu.vector_store %arg8[%c0_48, %c0_49], %95 {strides = array<i32>} : memref<32x128xf32, #tpu.memory_space<vmem>>, vector<32x128xf32>,
    } else {
    }
    %c0 = arith.constant 0 : index
    %c0_1 = arith.constant 0 : index
    %c0_2 = arith.constant 0 : index
    %c0_3 = arith.constant 0 : index
    %3 = vector.load %arg6[%c0, %c0_1, %c0_2, %c0_3] : memref<1x3x32x128xi8, #tpu.memory_space<vmem>>, vector<1x1x32x128xi8>
    %4 = vector.shape_cast %3 : vector<1x1x32x128xi8> to vector<32x128xi8>
    %5 = arith.sitofp %4 : vector<32x128xi8> to vector<32x128xf32>
    %c0_4 = arith.constant 0 : index
    %c1 = arith.constant 1 : index
    %c0_5 = arith.constant 0 : index
    %c0_6 = arith.constant 0 : index
    %6 = vector.load %arg6[%c0_4, %c1, %c0_5, %c0_6] : memref<1x3x32x128xi8, #tpu.memory_space<vmem>>, vector<1x1x32x128xi8>
    %7 = vector.shape_cast %6 : vector<1x1x32x128xi8> to vector<32x128xi8>
    %8 = arith.sitofp %7 : vector<32x128xi8> to vector<32x128xf32>
    %c0_7 = arith.constant 0 : index
    %c2 = arith.constant 2 : index
    %c0_8 = arith.constant 0 : index
    %c0_9 = arith.constant 0 : index
    %9 = vector.load %arg6[%c0_7, %c2, %c0_8, %c0_9] : memref<1x3x32x128xi8, #tpu.memory_space<vmem>>, vector<1x1x32x128xi8>
    %10 = vector.shape_cast %9 : vector<1x1x32x128xi8> to vector<32x128xi8>
    %11 = arith.sitofp %10 : vector<32x128xi8> to vector<32x128xf32>
    %cst = arith.constant 0.000000e+00 : f32
    %12 = vector.broadcast %cst : f32 to vector<32x128xf32>
    %13 = arith.index_cast %arg0 : i32 to index
    %c0_10 = arith.constant 0 : index
    %14 = memref.load %arg3[%13, %c0_10] : memref<2x9xf32, #tpu.memory_space<smem>>
    %15 = vector.broadcast %14 : f32 to vector<32x128xf32>
    %16 = arith.mulf %15, %5 : vector<32x128xf32>
    %17 = arith.index_cast %arg0 : i32 to index
    %c3 = arith.constant 3 : index
    %18 = memref.load %arg3[%17, %c3] : memref<2x9xf32, #tpu.memory_space<smem>>
    %19 = vector.broadcast %18 : f32 to vector<32x128xf32>
    %20 = arith.mulf %19, %8 : vector<32x128xf32>
    %21 = arith.addf %16, %20 : vector<32x128xf32>
    %22 = arith.index_cast %arg0 : i32 to index
    %c6 = arith.constant 6 : index
    %23 = memref.load %arg3[%22, %c6] : memref<2x9xf32, #tpu.memory_space<smem>>
    %24 = vector.broadcast %23 : f32 to vector<32x128xf32>
    %25 = arith.mulf %24, %11 : vector<32x128xf32>
    %26 = arith.addf %21, %25 : vector<32x128xf32>
    %c0_11 = arith.constant 0 : index
    %c0_12 = arith.constant 0 : index
    %c0_13 = arith.constant 0 : index
    %c0_14 = arith.constant 0 : index
    %27 = vector.load %arg4[%c0_11, %c0_12, %c0_13, %c0_14] : memref<1x3x32x128xf32, #tpu.memory_space<vmem>>, vector<1x1x32x128xf32>
    %28 = vector.shape_cast %27 : vector<1x1x32x128xf32> to vector<32x128xf32>
    %29 = arith.addf %28, %26 : vector<32x128xf32>
    %c0_15 = arith.constant 0 : index
    %c0_16 = arith.constant 0 : index
    %c0_17 = arith.constant 0 : index
    %c0_18 = arith.constant 0 : index
    %30 = vector.load %arg5[%c0_15, %c0_16, %c0_17, %c0_18] : memref<1x3x32x128xf32, #tpu.memory_space<vmem>>, vector<1x1x32x128xf32>
    %31 = vector.shape_cast %30 : vector<1x1x32x128xf32> to vector<32x128xf32>
    %32 = arith.subf %29, %31 : vector<32x128xf32>
    %33 = arith.mulf %32, %32 : vector<32x128xf32>
    %34 = arith.addf %12, %33 : vector<32x128xf32>
    %35 = arith.index_cast %arg0 : i32 to index
    %c1_19 = arith.constant 1 : index
    %36 = memref.load %arg3[%35, %c1_19] : memref<2x9xf32, #tpu.memory_space<smem>>
    %37 = vector.broadcast %36 : f32 to vector<32x128xf32>
    %38 = arith.mulf %37, %5 : vector<32x128xf32>
    %39 = arith.index_cast %arg0 : i32 to index
    %c4 = arith.constant 4 : index
    %40 = memref.load %arg3[%39, %c4] : memref<2x9xf32, #tpu.memory_space<smem>>
    %41 = vector.broadcast %40 : f32 to vector<32x128xf32>
    %42 = arith.mulf %41, %8 : vector<32x128xf32>
    %43 = arith.addf %38, %42 : vector<32x128xf32>
    %44 = arith.index_cast %arg0 : i32 to index
    %c7 = arith.constant 7 : index
    %45 = memref.load %arg3[%44, %c7] : memref<2x9xf32, #tpu.memory_space<smem>>
    %46 = vector.broadcast %45 : f32 to vector<32x128xf32>
    %47 = arith.mulf %46, %11 : vector<32x128xf32>
    %48 = arith.addf %43, %47 : vector<32x128xf32>
    %c0_20 = arith.constant 0 : index
    %c1_21 = arith.constant 1 : index
    %c0_22 = arith.constant 0 : index
    %c0_23 = arith.constant 0 : index
    %49 = vector.load %arg4[%c0_20, %c1_21, %c0_22, %c0_23] : memref<1x3x32x128xf32, #tpu.memory_space<vmem>>, vector<1x1x32x128xf32>
    %50 = vector.shape_cast %49 : vector<1x1x32x128xf32> to vector<32x128xf32>
    %51 = arith.addf %50, %48 : vector<32x128xf32>
    %c0_24 = arith.constant 0 : index
    %c1_25 = arith.constant 1 : index
    %c0_26 = arith.constant 0 : index
    %c0_27 = arith.constant 0 : index
    %52 = vector.load %arg5[%c0_24, %c1_25, %c0_26, %c0_27] : memref<1x3x32x128xf32, #tpu.memory_space<vmem>>, vector<1x1x32x128xf32>
    %53 = vector.shape_cast %52 : vector<1x1x32x128xf32> to vector<32x128xf32>
    %54 = arith.subf %51, %53 : vector<32x128xf32>
    %55 = arith.mulf %54, %54 : vector<32x128xf32>
    %56 = arith.addf %34, %55 : vector<32x128xf32>
    %57 = arith.index_cast %arg0 : i32 to index
    %c2_28 = arith.constant 2 : index
    %58 = memref.load %arg3[%57, %c2_28] : memref<2x9xf32, #tpu.memory_space<smem>>
    %59 = vector.broadcast %58 : f32 to vector<32x128xf32>
    %60 = arith.mulf %59, %5 : vector<32x128xf32>
    %61 = arith.index_cast %arg0 : i32 to index
    %c5 = arith.constant 5 : index
    %62 = memref.load %arg3[%61, %c5] : memref<2x9xf32, #tpu.memory_space<smem>>
    %63 = vector.broadcast %62 : f32 to vector<32x128xf32>
    %64 = arith.mulf %63, %8 : vector<32x128xf32>
    %65 = arith.addf %60, %64 : vector<32x128xf32>
    %66 = arith.index_cast %arg0 : i32 to index
    %c8 = arith.constant 8 : index
    %67 = memref.load %arg3[%66, %c8] : memref<2x9xf32, #tpu.memory_space<smem>>
    %68 = vector.broadcast %67 : f32 to vector<32x128xf32>
    %69 = arith.mulf %68, %11 : vector<32x128xf32>
    %70 = arith.addf %65, %69 : vector<32x128xf32>
    %c0_29 = arith.constant 0 : index
    %c2_30 = arith.constant 2 : index
    %c0_31 = arith.constant 0 : index
    %c0_32 = arith.constant 0 : index
    %71 = vector.load %arg4[%c0_29, %c2_30, %c0_31, %c0_32] : memref<1x3x32x128xf32, #tpu.memory_space<vmem>>, vector<1x1x32x128xf32>
    %72 = vector.shape_cast %71 : vector<1x1x32x128xf32> to vector<32x128xf32>
    %73 = arith.addf %72, %70 : vector<32x128xf32>
    %c0_33 = arith.constant 0 : index
    %c2_34 = arith.constant 2 : index
    %c0_35 = arith.constant 0 : index
    %c0_36 = arith.constant 0 : index
    %74 = vector.load %arg5[%c0_33, %c2_34, %c0_35, %c0_36] : memref<1x3x32x128xf32, #tpu.memory_space<vmem>>, vector<1x1x32x128xf32>
    %75 = vector.shape_cast %74 : vector<1x1x32x128xf32> to vector<32x128xf32>
    %76 = arith.subf %73, %75 : vector<32x128xf32>
    %77 = arith.mulf %76, %76 : vector<32x128xf32>
    %78 = arith.addf %56, %77 : vector<32x128xf32>
    %cst_37 = arith.constant 0.00999999977 : f32
    %79 = vector.broadcast %cst_37 : f32 to vector<32x128xf32>
    %80 = arith.cmpf oge, %78, %79 : vector<32x128xf32>
    %cst_38 = arith.constant 4.000000e+00 : f32
    %81 = vector.broadcast %cst_38 : f32 to vector<32x128xf32>
    %82 = arith.cmpf ole, %78, %81 : vector<32x128xf32>
    %83 = arith.andi %80, %82 : vector<32x128xi1>
    %cst_39 = arith.constant 1.000000e+00 : f32
    %84 = vector.broadcast %cst_39 : f32 to vector<32x128xf32>
    %85 = arith.select %83, %78, %84 : vector<32x128xi1>, vector<32x128xf32>
    %86 = tpu.reciprocal %85 : vector<32x128xf32> -> vector<32x128xf32>
    %c0_40 = arith.constant 0 : index
    %c0_41 = arith.constant 0 : index
    %87 = vector.load %arg8[%c0_40, %c0_41] : memref<32x128xf32, #tpu.memory_space<vmem>>, vector<32x128xf32>
    %cst_42 = arith.constant 0.000000e+00 : f32
    %88 = vector.broadcast %cst_42 : f32 to vector<32x128xf32>
    %89 = arith.select %83, %86, %88 : vector<32x128xi1>, vector<32x128xf32>
    %90 = arith.addf %87, %89 : vector<32x128xf32>
    %c0_43 = arith.constant 0 : index
    %c0_44 = arith.constant 0 : index
    %91 = vector.load %arg8[%c0_43, %c0_44] : memref<32x128xf32, #tpu.memory_space<vmem>>, vector<32x128xf32>
    tpu.vector_store %arg8[%c0_43, %c0_44], %90 {strides = array<i32>} : memref<32x128xf32, #tpu.memory_space<vmem>>, vector<32x128xf32>,
    %c0_i32_45 = arith.constant 0 : i32
    %92 = arith.cmpi eq, %arg2, %c0_i32_45 : i32
    %93 = arith.extui %92 : i1 to i32
    %c0_i32_46 = arith.constant 0 : i32
    %94 = arith.cmpi ne, %93, %c0_i32_46 : i32
    scf.if %94 {
      %c0_47 = arith.constant 0 : index
      %c0_48 = arith.constant 0 : index
      %95 = vector.load %arg8[%c0_47, %c0_48] : memref<32x128xf32, #tpu.memory_space<vmem>>, vector<32x128xf32>
      %96 = vector.shape_cast %95 : vector<32x128xf32> to vector<1x32x128xf32>
      %cst_49 = arith.constant dense<0.000000e+00> : vector<1xf32>
      %97 = vector.multi_reduction <add>, %96, %cst_49 [1, 2] : vector<1x32x128xf32> to vector<1xf32>
      %98 = vector.shape_cast %97 : vector<1xf32> to vector<1x1x1xf32>
      %99 = vector.extract %98[0, 0, 0] : f32 from vector<1x1x1xf32>
      %cst_50 = arith.constant 5.000000e-01 : f32
      %100 = arith.mulf %cst_50, %99 : f32
      %101 = vector.broadcast %100 : f32 to vector<1x1x8x128xf32>
      %c0_51 = arith.constant 0 : index
      %c0_52 = arith.constant 0 : index
      %c0_53 = arith.constant 0 : index
      %c0_54 = arith.constant 0 : index
      %102 = vector.load %arg7[%c0_51, %c0_52, %c0_53, %c0_54] : memref<1x1x8x128xf32, #tpu.memory_space<vmem>>, vector<1x1x8x128xf32>
      tpu.vector_store %arg7[%c0_51, %c0_52, %c0_53, %c0_54], %101 {strides = array<i32>} : memref<1x1x8x128xf32, #tpu.memory_space<vmem>>, vector<1x1x8x128xf32>,
    } else {
    }
    return
  }
  func.func @transform_0(%arg0: i32, %arg1: i32, %arg2: i32) -> (i32, i32) {
    %c0_i32 = arith.constant 0 : i32
    %c0_i32_0 = arith.constant 0 : i32
    %c0_i32_1 = arith.constant 0 : i32
    return %c0_i32, %c0_i32_0 : i32, i32
  }
  func.func @transform_1(%arg0: i32, %arg1: i32, %arg2: i32) -> (i32, i32, i32, i32) {
    %c1_i32 = arith.constant 1 : i32
    %0 = arith.muli %arg1, %c1_i32 : i32
    %1 = arith.addi %0, %arg2 : i32
    %c0_i32 = arith.constant 0 : i32
    %c0_i32_0 = arith.constant 0 : i32
    %c0_i32_1 = arith.constant 0 : i32
    return %arg0, %c0_i32, %1, %c0_i32_0 : i32, i32, i32, i32
  }
  func.func @transform_2(%arg0: i32, %arg1: i32, %arg2: i32) -> (i32, i32, i32, i32) {
    %c1_i32 = arith.constant 1 : i32
    %0 = arith.muli %arg1, %c1_i32 : i32
    %1 = arith.addi %0, %arg2 : i32
    %c0_i32 = arith.constant 0 : i32
    %c0_i32_0 = arith.constant 0 : i32
    %c0_i32_1 = arith.constant 0 : i32
    return %arg0, %c0_i32, %1, %c0_i32_0 : i32, i32, i32, i32
  }
  func.func @transform_3(%arg0: i32, %arg1: i32, %arg2: i32) -> (i32, i32, i32, i32) {
    %c1_i32 = arith.constant 1 : i32
    %0 = arith.muli %arg1, %c1_i32 : i32
    %1 = arith.addi %0, %arg2 : i32
    %c0_i32 = arith.constant 0 : i32
    %c0_i32_0 = arith.constant 0 : i32
    %c0_i32_1 = arith.constant 0 : i32
    return %arg0, %c0_i32, %1, %c0_i32_0 : i32, i32, i32, i32
  }
  func.func @transform_4(%arg0: i32, %arg1: i32, %arg2: i32) -> (i32, i32, i32, i32) {
    %c0_i32 = arith.constant 0 : i32
    %c0_i32_0 = arith.constant 0 : i32
    %c0_i32_1 = arith.constant 0 : i32
    return %arg0, %arg1, %c0_i32, %c0_i32_0 : i32, i32, i32, i32
  }
}

</mosaic_0001>

<llo_original>
// kernel: tpu_custom_call.1
$region0: #{tpu_custom_call.1}
  #allocation0 [shape = 'u32[]', space=smem, size = 0x4, offset = 0x4, fixed_abs, tag = 'smem constant byte address 0x4 - core index']
  #allocation1 [shape = 'u32[72,128]{1,0:T(1,128)}', space=vmem, size = 0x9000, scoped, tag = 'internal scratch']
  #allocation2 [shape = 'f32[32,128]{1,0:T(8,128)}', space=vmem, size = 0x4000, scoped, tag = 'scratch operand']
  %s0 = inlined_call_operand.hbm [shape: f32[2,9], index: 0, kind: input, shape index: {}]
  %s1 = inlined_call_operand.hbm [shape: f32[2,3,32,128], index: 1, kind: input, shape index: {}]
  %s2 = inlined_call_operand.hbm [shape: f32[2,3,32,128], index: 2, kind: input, shape index: {}]
  %s3 = inlined_call_operand.hbm [shape: s8[2,3,32,128], index: 3, kind: input, shape index: {}]
  %s4 = inlined_call_operand.hbm [shape: f32[2,1,8,128], index: 4, kind: output, shape index: {}]
  %s5 = sld [smem:[#allocation0]]
  $region73: #{tpu_custom_call.1} parent=0
    _
  %s7 = ssub.s32 1, %s5
  %s8 = scalar_select 0, %s7, %s5
  $region1: #{tpu_custom_call.1} parent=0
    #allocation3 [shape = 'u8[1024]{0}', space=smem, size = 0x400, scoped, tag = 'input window, operand 0, single buffered']
    #allocation4 [shape = 's32[2]{0}', space=sflag, size = 0x8, scoped, tag = 'scoped memory for tpu_custom_call.1']
    #allocation5 [shape = 's32[2]{0}', space=sflag, size = 0x8, scoped, tag = 'scoped memory for tpu_custom_call.1']
    #allocation6 [shape = 's32[2]{0}', space=sflag, size = 0x8, scoped, tag = 'scoped memory for tpu_custom_call.1']
    #allocation7 [shape = 'u8[98304]{0}', space=vmem, size = 0x18000, scoped, tag = 'input window, operand 1']
    #allocation8 [shape = 'u8[98304]{0}', space=vmem, size = 0x18000, scoped, tag = 'input window, operand 2']
    #allocation9 [shape = 's32[2]{0}', space=sflag, size = 0x8, scoped, tag = 'scoped memory for tpu_custom_call.1']
    #allocation10 [shape = 'u8[24576]{0}', space=vmem, size = 0x6000, scoped, tag = 'input window, operand 3']
    #allocation11 [shape = 'u8[8192]{0}', space=vmem, size = 0x2000, scoped, tag = 'output window, operand 0']
    %9 = vsyncpa [#allocation6], 0
    %10 = vsyncpa [#allocation4], 0
    %s11 = scalar_lea.sflag [#allocation4], 1
    %12 = vsyncpa %s11, 0
    %13 = vsyncpa [#allocation9], 0
    %s14 = scalar_lea.sflag [#allocation9], 1
    %15 = vsyncpa %s14, 0
    %16 = vsyncpa [#allocation5], 0
    %s17 = scalar_lea.sflag [#allocation5], 1
    %18 = vsyncpa %s17, 0
    loop: start=0, step=1, limit=4
    $region2: #{tpu_custom_call.1} parent=1 // loop_pre_header
      _
    $region3: #{tpu_custom_call.1} parent=1 // loop_header
      %s20 = sphi 0, %s24
      %p21 = scmp.ge.s32.totalorder %s20, 4
      %s27 = sphi 0, %s46
      %s28 = sphi 0, %s42
      %s29 = sphi 0, %s38
      %s30 = sphi 0, %s27
      %s31 = sphi 0, %s28
      %s32 = sphi 0, %s29
      %s33 = sphi 0, %s30
      %s34 = sphi 0, %s31
      %s35 = sphi 0, %s32
      %s47 = sphi 0, %s47
      %s49 = sphi 0, %s47
      %s50 = sphi 0, %s49
      %s64 = sphi 0, %s50
      %s74 = sphi 0, %s76
      %s77 = sphi 0, %s74
      %s78 = sphi 0, %s77
      %s94 = sphi 0, %s78
      %s104 = sphi 0, %s106
      %s107 = sphi 0, %s104
      %s108 = sphi 0, %s107
      %s124 = sphi 0, %s108
      %s134 = sphi 0, %s136
      %s137 = sphi 0, %s134
      %s138 = sphi 0, %s137
      %s154 = sphi 0, %s138
      %s162 = sphi 0, %s164
      %s165 = sphi 0, %s162
      %s166 = sphi 0, %s165
      %s182 = sphi 0, %s166
    $region4: #{tpu_custom_call.1} parent=1 // loop_header_branch
      %23 = sbr.rel (%p21) target = $region8
    $region5: #{tpu_custom_call.1} parent=1 // loop_body
      %s25 = ssub.s32 %s20, 1
      %s26 = ssub.s32 %s20, 2
      %s36 = sadd.s32 1, %s29
      %p37 = scmp.ge.s32.totalorder %s36, 1
      %s38 = scalar_select %p37, 0, %s36
      %s39 = sadd.s32 1, %s28
      %s40 = scalar_select %p37, %s39, %s28
      %p41 = scmp.ge.s32.totalorder %s40, 1
      %s42 = scalar_select %p41, 0, %s40
      %s43 = sadd.s32 1, %s27
      %s44 = scalar_select %p41, %s43, %s27
      %p45 = scmp.ge.s32.totalorder %s44, 2
      %s46 = scalar_select %p45, 0, %s44
      %s48 = sadd.s32 %s47, 1
      %p51 = scmp.eq.s32.totalorder %s20, 1
      %p52 = scmp.ne.s32.totalorder %s47, %s49
      %p53 = scmp.eq.s32.totalorder %s20, 0
      %p54 = por %p52, %p53
      %p55 = scmp.ne.s32.totalorder %s47, %s49
      %p56 = scmp.eq.s32.totalorder %s25, 1
      %p57 = por %p55, %p56
      %p58 = scmp.ne.s32.totalorder %s49, %s50
      %p59 = scmp.eq.s32.totalorder %s25, 0
      %p60 = por %p58, %p59
      %p61 = scmp.ne.s32.totalorder %s49, %s50
      %p62 = scmp.eq.s32.totalorder %s26, 1
      %p63 = por %p61, %p62
      %p65 = scmp.ne.s32.totalorder %s50, %s64
      %p66 = scmp.eq.s32.totalorder %s26, 0
      %p67 = por %p65, %p66
      %s68 = sadd.s32 %s28, %s29
      %s69 = sadd.s32 %s42, %s38
      %s70 = ssub.s32 %s27, %s46
      %s71 = ssub.s32 %s68, %s69
      %s72 = sor.u32 %s70, %s71
      %p73 = scmp.eq.s32.totalorder %s72, 0
      %s75 = sadd.s32 %s74, 1
      %s76 = scalar_select %p73, %s74, %s75
      %p79 = pneg %p73
      %p80 = scmp.eq.s32.totalorder %s20, 1
      %p81 = por %p79, %p80
      %p82 = scmp.ne.s32.totalorder %s74, %s77
      %p83 = scmp.eq.s32.totalorder %s20, 0
      %p84 = por %p82, %p83
      %p85 = scmp.ne.s32.totalorder %s74, %s77
      %p86 = scmp.eq.s32.totalorder %s25, 1
      %p87 = por %p85, %p86
      %p88 = scmp.ne.s32.totalorder %s77, %s78
      %p89 = scmp.eq.s32.totalorder %s25, 0
      %p90 = por %p88, %p89
      %p91 = scmp.ne.s32.totalorder %s77, %s78
      %p92 = scmp.eq.s32.totalorder %s26, 1
      %p93 = por %p91, %p92
      %p95 = scmp.ne.s32.totalorder %s78, %s94
      %p96 = scmp.eq.s32.totalorder %s26, 0
      %p97 = por %p95, %p96
      %s98 = sadd.s32 %s28, %s29
      %s99 = sadd.s32 %s42, %s38
      %s100 = ssub.s32 %s27, %s46
      %s101 = ssub.s32 %s98, %s99
      %s102 = sor.u32 %s100, %s101
      %p103 = scmp.eq.s32.totalorder %s102, 0
      %s105 = sadd.s32 %s104, 1
      %s106 = scalar_select %p103, %s104, %s105
      %p109 = pneg %p103
      %p110 = scmp.eq.s32.totalorder %s20, 1
      %p111 = por %p109, %p110
      %p112 = scmp.ne.s32.totalorder %s104, %s107
      %p113 = scmp.eq.s32.totalorder %s20, 0
      %p114 = por %p112, %p113
      %p115 = scmp.ne.s32.totalorder %s104, %s107
      %p116 = scmp.eq.s32.totalorder %s25, 1
      %p117 = por %p115, %p116
      %p118 = scmp.ne.s32.totalorder %s107, %s108
      %p119 = scmp.eq.s32.totalorder %s25, 0
      %p120 = por %p118, %p119
      %p121 = scmp.ne.s32.totalorder %s107, %s108
      %p122 = scmp.eq.s32.totalorder %s26, 1
      %p123 = por %p121, %p122
      %p125 = scmp.ne.s32.totalorder %s108, %s124
      %p126 = scmp.eq.s32.totalorder %s26, 0
      %p127 = por %p125, %p126
      %s128 = sadd.s32 %s28, %s29
      %s129 = sadd.s32 %s42, %s38
      %s130 = ssub.s32 %s27, %s46
      %s131 = ssub.s32 %s128, %s129
      %s132 = sor.u32 %s130, %s131
      %p133 = scmp.eq.s32.totalorder %s132, 0
      %s135 = sadd.s32 %s134, 1
      %s136 = scalar_select %p133, %s134, %s135
      %p139 = pneg %p133
      %p140 = scmp.eq.s32.totalorder %s20, 1
      %p141 = por %p139, %p140
      %p142 = scmp.ne.s32.totalorder %s134, %s137
      %p143 = scmp.eq.s32.totalorder %s20, 0
      %p144 = por %p142, %p143
      %p145 = scmp.ne.s32.totalorder %s134, %s137
      %p146 = scmp.eq.s32.totalorder %s25, 1
      %p147 = por %p145, %p146
      %p148 = scmp.ne.s32.totalorder %s137, %s138
      %p149 = scmp.eq.s32.totalorder %s25, 0
      %p150 = por %p148, %p149
      %p151 = scmp.ne.s32.totalorder %s137, %s138
      %p152 = scmp.eq.s32.totalorder %s26, 1
      %p153 = por %p151, %p152
      %p155 = scmp.ne.s32.totalorder %s138, %s154
      %p156 = scmp.eq.s32.totalorder %s26, 0
      %p157 = por %p155, %p156
      %s158 = ssub.s32 %s27, %s46
      %s159 = ssub.s32 %s28, %s42
      %s160 = sor.u32 %s158, %s159
      %p161 = scmp.eq.s32.totalorder %s160, 0
      %s163 = sadd.s32 %s162, 1
      %s164 = scalar_select %p161, %s162, %s163
      %p167 = pneg %p161
      %p168 = scmp.eq.s32.totalorder %s20, 1
      %p169 = por %p167, %p168
      %p170 = scmp.ne.s32.totalorder %s162, %s165
      %p171 = scmp.eq.s32.totalorder %s20, 0
      %p172 = por %p170, %p171
      %p173 = scmp.ne.s32.totalorder %s162, %s165
      %p174 = scmp.eq.s32.totalorder %s25, 1
      %p175 = por %p173, %p174
      %p176 = scmp.ne.s32.totalorder %s165, %s166
      %p177 = scmp.eq.s32.totalorder %s25, 0
      %p178 = por %p176, %p177
      %p179 = scmp.ne.s32.totalorder %s165, %s166
      %p180 = scmp.eq.s32.totalorder %s26, 1
      %p181 = por %p179, %p180
      %p183 = scmp.ne.s32.totalorder %s166, %s182
      %p184 = scmp.eq.s32.totalorder %s26, 0
      %p185 = por %p183, %p184
      %p186 = scmp.le.s32.totalorder 1, %s20
      %p187 = scmp.lt.s32.totalorder %s20, 3
      %p188 = pnand %p186, %p187
      %p189 = pneg %p188
      // Predicated region
      $region9: #{tpu_custom_call.1} parent=5 // pred_check
        _
      $region10: #{tpu_custom_call.1} parent=5 // pred_check_branch
        %191 = sbr.rel (%p188) target = $region12
      $region11: #{tpu_custom_call.1} parent=5 // pred_region
        %s192 = ssub.s32 %s20, 1
        // Predicated region
        $region13: #{tpu_custom_call.1} parent=11 // pred_check
          %p193 = pneg %p60
        $region14: #{tpu_custom_call.1} parent=11 // pred_check_branch
          %195 = sbr.rel (%p193) target = $region16
        $region15: #{tpu_custom_call.1} parent=11 // pred_region
          %197 = vsyncadd [#allocation6], 0
          %s199 = sshll.u32 %s0, 4
          %s200 = int_to_ptr.hbm [resolvable:$true] %s199
          %202 = dma.hbm_to_smem %s200, 32, [#allocation3], [#allocation6]
        $region16: #{tpu_custom_call.1} parent=11 // pred_fallthru
          _
      $region12: #{tpu_custom_call.1} parent=5 // pred_fallthru
        _
      %p203 = scmp.lt.s32.totalorder %s20, 2
      // Predicated region
      $region17: #{tpu_custom_call.1} parent=5 // pred_check
        %p204 = pneg %p203
      $region18: #{tpu_custom_call.1} parent=5 // pred_check_branch
        %206 = sbr.rel (%p204) target = $region20
      $region19: #{tpu_custom_call.1} parent=5 // pred_region
        // Predicated region
        $region21: #{tpu_custom_call.1} parent=19 // pred_check
          %p207 = pneg %p84
        $region22: #{tpu_custom_call.1} parent=19 // pred_check_branch
          %209 = sbr.rel (%p207) target = $region24
        $region23: #{tpu_custom_call.1} parent=19 // pred_region
          %s210 = sand.u32 %s74, 1
          %s211 = scalar_lea.sflag [#allocation4], %s210
          %s212 = sand.u32 %s74, 1
          %s213 = smul.addr %s212, 96
          %s214 = scalar_lea.vmem [#allocation7], %s213
          %s215 = sadd.s32 %s28, %s29
          %s216 = smul.u32 4, %s215
          %218 = vsyncadd %s211, 0
          %s219 = smul.addr %s27, 12
          %s220 = sadd.s32 %s216, %s219
          %s221 = smul.addr %s220, 8
          %s222 = scalar_lea.hbm %s1, %s221
          %s223 = sshll.u32 %s222, 4
          %s224 = int_to_ptr.hbm [resolvable:$true] %s223
          %s225 = sshll.u32 %s214, 4
          %s226 = int_to_ptr.vmem [resolvable:$true] %s225
          %231 = dma.hbm_to_vmem [thread:$0]  %s224, 1536, %s226, %s211, 128, 128, 8
        $region24: #{tpu_custom_call.1} parent=19 // pred_fallthru
          _
        // Predicated region
        $region25: #{tpu_custom_call.1} parent=19 // pred_check
          %p232 = pneg %p114
        $region26: #{tpu_custom_call.1} parent=19 // pred_check_branch
          %234 = sbr.rel (%p232) target = $region28
        $region27: #{tpu_custom_call.1} parent=19 // pred_region
          %s235 = sand.u32 %s20, 1
          %s236 = scalar_lea.sflag [#allocation9], %s235
          %s237 = sand.u32 %s104, 1
          %s238 = smul.addr %s237, 96
          %s239 = scalar_lea.vmem [#allocation8], %s238
          %s240 = sadd.s32 %s28, %s29
          %s241 = smul.u32 4, %s240
          %243 = vsyncadd %s236, 0
          %s244 = smul.addr %s27, 12
          %s245 = sadd.s32 %s241, %s244
          %s246 = smul.addr %s245, 8
          %s247 = scalar_lea.hbm %s2, %s246
          %s248 = sshll.u32 %s247, 4
          %s249 = int_to_ptr.hbm [resolvable:$true] %s248
          %s250 = sshll.u32 %s239, 4
          %s251 = int_to_ptr.vmem [resolvable:$true] %s250
          %256 = dma.hbm_to_vmem [thread:$0]  %s249, 1536, %s251, %s236, 128, 128, 8
        $region28: #{tpu_custom_call.1} parent=19 // pred_fallthru
          _
        // Predicated region
        $region29: #{tpu_custom_call.1} parent=19 // pred_check
          %p257 = pneg %p144
        $region30: #{tpu_custom_call.1} parent=19 // pred_check_branch
          %259 = sbr.rel (%p257) target = $region32
        $region31: #{tpu_custom_call.1} parent=19 // pred_region
          %s260 = sand.u32 %s20, 1
          %s261 = scalar_lea.sflag [#allocation9], %s260
          %s262 = sand.u32 %s134, 1
          %s263 = smul.addr %s262, 24
          %s264 = scalar_lea.vmem [#allocation10], %s263
          %s265 = sadd.s32 %s28, %s29
          %267 = vsyncadd %s261, 0
          %s268 = smul.addr %s27, 3
          %s269 = sadd.s32 %s265, %s268
          %s270 = smul.addr %s269, 8
          %s271 = scalar_lea.hbm %s3, %s270
          %s272 = sshll.u32 %s271, 4
          %s273 = int_to_ptr.hbm [resolvable:$true] %s272
          %s274 = sshll.u32 %s264, 4
          %s275 = int_to_ptr.vmem [resolvable:$true] %s274
          %280 = dma.hbm_to_vmem [thread:$0]  %s273, 384, %s275, %s261, 128, 128, 8
        $region32: #{tpu_custom_call.1} parent=19 // pred_fallthru
          _
      $region20: #{tpu_custom_call.1} parent=5 // pred_fallthru
        _
      %p281 = scmp.le.s32.totalorder 1, %s20
      %p282 = scmp.lt.s32.totalorder %s20, 3
      %p283 = pnand %p281, %p282
      %p284 = pneg %p283
      // Predicated region
      $region33: #{tpu_custom_call.1} parent=5 // pred_check
        _
      $region34: #{tpu_custom_call.1} parent=5 // pred_check_branch
        %286 = sbr.rel (%p283) target = $region36
      $region35: #{tpu_custom_call.1} parent=5 // pred_region
        %s287 = ssub.s32 %s20, 1
        // Predicated region
        $region37: #{tpu_custom_call.1} parent=35 // pred_check
          %p288 = pneg %p60
        $region38: #{tpu_custom_call.1} parent=35 // pred_check_branch
          %290 = sbr.rel (%p288) target = $region40
        $region39: #{tpu_custom_call.1} parent=35 // pred_region
          %292 = dma.done [#allocation6], 32
        $region40: #{tpu_custom_call.1} parent=35 // pred_fallthru
          _
        %s293 = sand.u32 %s77, 1
        %s294 = scalar_lea.sflag [#allocation4], %s293
        %s295 = sand.u32 %s77, 1
        %s296 = smul.addr %s295, 96
        %s297 = scalar_lea.vmem [#allocation7], %s296
        // Predicated region
        $region41: #{tpu_custom_call.1} parent=35 // pred_check
          %p298 = pneg %p90
        $region42: #{tpu_custom_call.1} parent=35 // pred_check_branch
          %300 = sbr.rel (%p298) target = $region44
        $region43: #{tpu_custom_call.1} parent=35 // pred_region
          %302 = dma.done %s294, 1536
        $region44: #{tpu_custom_call.1} parent=35 // pred_fallthru
          _
        %s303 = sand.u32 %s25, 1
        %s304 = scalar_lea.sflag [#allocation9], %s303
        %s305 = sand.u32 %s107, 1
        %s306 = smul.addr %s305, 96
        %s307 = scalar_lea.vmem [#allocation8], %s306
        // Predicated region
        $region45: #{tpu_custom_call.1} parent=35 // pred_check
          %p308 = pneg %p120
        $region46: #{tpu_custom_call.1} parent=35 // pred_check_branch
          %310 = sbr.rel (%p308) target = $region48
        $region47: #{tpu_custom_call.1} parent=35 // pred_region
          %312 = dma.done %s304, 1536
        $region48: #{tpu_custom_call.1} parent=35 // pred_fallthru
          _
        %s313 = sand.u32 %s25, 1
        %s314 = scalar_lea.sflag [#allocation9], %s313
        %s315 = sand.u32 %s137, 1
        %s316 = smul.addr %s315, 24
        %s317 = scalar_lea.vmem [#allocation10], %s316
        // Predicated region
        $region49: #{tpu_custom_call.1} parent=35 // pred_check
          %p318 = pneg %p150
        $region50: #{tpu_custom_call.1} parent=35 // pred_check_branch
          %320 = sbr.rel (%p318) target = $region52
        $region51: #{tpu_custom_call.1} parent=35 // pred_region
          %322 = dma.done %s314, 384
        $region52: #{tpu_custom_call.1} parent=35 // pred_fallthru
          _
        %323 = sfence
        %p324 = pneg %p60
        %p325 = pneg %p57
        %s326 = sand.u32 %s77, 1
        %s327 = scalar_lea.sflag [#allocation4], %s326
        %s328 = sand.u32 %s77, 1
        %s329 = smul.addr %s328, 96
        %s330 = scalar_lea.vmem [#allocation7], %s329
        %p331 = pneg %p90
        %p332 = pneg %p87
        %s333 = sand.u32 %s25, 1
        %s334 = scalar_lea.sflag [#allocation9], %s333
        %s335 = sand.u32 %s107, 1
        %s336 = smul.addr %s335, 96
        %s337 = scalar_lea.vmem [#allocation8], %s336
        %p338 = pneg %p120
        %p339 = pneg %p117
        %s340 = sand.u32 %s25, 1
        %s341 = scalar_lea.sflag [#allocation9], %s340
        %s342 = sand.u32 %s137, 1
        %s343 = smul.addr %s342, 24
        %s344 = scalar_lea.vmem [#allocation10], %s343
        %p345 = pneg %p150
        %p346 = pneg %p147
        %p347 = pneg %p178
        %p348 = pneg %p175
        %s349 = sand.u32 %s165, 1
        %s350 = scalar_lea.sflag [#allocation5], %s349
        %s351 = sand.u32 %s165, 1
        %s352 = smul.addr %s351, 8
        %s353 = scalar_lea.vmem [#allocation11], %s352
        %s354 = sadd.s32 %s31, %s32
        %s355 = smul.u32 4, %s354
        %s356 = sadd.s32 %s31, %s32
        %s357 = smul.u32 4, %s356
        %s358 = sadd.s32 %s31, %s32
        %p359 = scmp.eq.s32.totalorder %s32, 0
        // Predicated region
        $region53: #{tpu_custom_call.1} parent=35 // pred_check
          %p360 = pneg %p359
        $region54: #{tpu_custom_call.1} parent=35 // pred_check_branch
          %362 = sbr.rel (%p360) target = $region56
        $region55: #{tpu_custom_call.1} parent=35 // pred_region
          %363 = vst [vmem:[#allocation2] sm:$0xff] 0.0
          %364 = vst [vmem:[#allocation2 + $0x8] sm:$0xff] 0.0
          %365 = vst [vmem:[#allocation2 + $0x10] sm:$0xff] 0.0
          %366 = vst [vmem:[#allocation2 + $0x18] sm:$0xff] 0.0
        $region56: #{tpu_custom_call.1} parent=35 // pred_fallthru
          _
        %v367 = vld [vmem:[%s317] sm:$0xff]
        %v368 = vunpack.c.0.s8 %v367
        %v369 = vunpack.c.1.s8 %v367
        %v370 = vunpack.c.2.s8 %v367
        %v371 = vunpack.c.3.s8 %v367
        %v372 = vcvt.s32.f32 %v368
        %v373 = vcvt.s32.f32 %v369
        %v374 = vcvt.s32.f32 %v370
        %v375 = vcvt.s32.f32 %v371
        %s376 = scalar_lea.vmem %s317, 8 [#allocation10]
        %v377 = vld [vmem:[%s376] sm:$0xff]
        %v378 = vunpack.c.0.s8 %v377
        %v379 = vunpack.c.1.s8 %v377
        %v380 = vunpack.c.2.s8 %v377
        %v381 = vunpack.c.3.s8 %v377
        %v382 = vcvt.s32.f32 %v378
        %v383 = vcvt.s32.f32 %v379
        %v384 = vcvt.s32.f32 %v380
        %v385 = vcvt.s32.f32 %v381
        %s386 = scalar_lea.vmem %s317, 16 [#allocation10]
        %v387 = vld [vmem:[%s386] sm:$0xff]
        %v388 = vunpack.c.0.s8 %v387
        %v389 = vunpack.c.1.s8 %v387
        %v390 = vunpack.c.2.s8 %v387
        %v391 = vunpack.c.3.s8 %v387
        %v392 = vcvt.s32.f32 %v388
        %v393 = vcvt.s32.f32 %v389
        %v394 = vcvt.s32.f32 %v390
        %v395 = vcvt.s32.f32 %v391
        %s396 = smul.u32 %s30, 128
        %s397 = sld [smem:[#allocation3 + %s396]]
        %v398 = vstv %s397
        %v399 = vmul.f32 %v398, %v372
        %v400 = vmul.f32 %v398, %v373
        %v401 = vmul.f32 %v398, %v374
        %v402 = vmul.f32 %v398, %v375
        %s403 = sadd.s32 %s396, 3
        %s404 = sld [smem:[#allocation3 + %s403]]
        %v405 = vstv %s404
        %v406 = vmul.f32 %v405, %v382
        %v407 = vmul.f32 %v405, %v383
        %v408 = vmul.f32 %v405, %v384
        %v409 = vmul.f32 %v405, %v385
        %v410 = vadd.f32 %v399, %v406
        %v411 = vadd.f32 %v400, %v407
        %v412 = vadd.f32 %v401, %v408
        %v413 = vadd.f32 %v402, %v409
        %s414 = sadd.s32 %s396, 6
        %s415 = sld [smem:[#allocation3 + %s414]]
        %v416 = vstv %s415
        %v417 = vmul.f32 %v416, %v392
        %v418 = vmul.f32 %v416, %v393
        %v419 = vmul.f32 %v416, %v394
        %v420 = vmul.f32 %v416, %v395
        %v421 = vadd.f32 %v410, %v417
        %v422 = vadd.f32 %v411, %v418
        %v423 = vadd.f32 %v412, %v419
        %v424 = vadd.f32 %v413, %v420
        %v425 = vld [vmem:[%s297] sm:$0xff]
        %v426 = vld [vmem:[%s297 + $0x8] sm:$0xff]
        %v427 = vld [vmem:[%s297 + $0x10] sm:$0xff]
        %v428 = vld [vmem:[%s297 + $0x18] sm:$0xff]
        %v429 = vadd.f32 %v425, %v421
        %v430 = vadd.f32 %v426, %v422
        %v431 = vadd.f32 %v427, %v423
        %v432 = vadd.f32 %v428, %v424
        %v433 = vld [vmem:[%s307] sm:$0xff]
        %v434 = vld [vmem:[%s307 + $0x8] sm:$0xff]
        %v435 = vld [vmem:[%s307 + $0x10] sm:$0xff]
        %v436 = vld [vmem:[%s307 + $0x18] sm:$0xff]
        %v437 = vsub.f32 %v429, %v433
        %v438 = vsub.f32 %v430, %v434
        %v439 = vsub.f32 %v431, %v435
        %v440 = vsub.f32 %v432, %v436
        %v441 = vmul.f32 %v437, %v437
        %v442 = vmul.f32 %v438, %v438
        %v443 = vmul.f32 %v439, %v439
        %v444 = vmul.f32 %v440, %v440
        %v445 = vadd.f32 %v441, 0.0
        %v446 = vadd.f32 %v442, 0.0
        %v447 = vadd.f32 %v443, 0.0
        %v448 = vadd.f32 %v444, 0.0
        %s449 = sadd.s32 %s396, 1
        %s450 = sld [smem:[#allocation3 + %s449]]
        %v451 = vstv %s450
        %v452 = vmul.f32 %v451, %v372
        %v453 = vmul.f32 %v451, %v373
        %v454 = vmul.f32 %v451, %v374
        %v455 = vmul.f32 %v451, %v375
        %s456 = sadd.s32 %s396, 4
        %s457 = sld [smem:[#allocation3 + %s456]]
        %v458 = vstv %s457
        %v459 = vmul.f32 %v458, %v382
        %v460 = vmul.f32 %v458, %v383
        %v461 = vmul.f32 %v458, %v384
        %v462 = vmul.f32 %v458, %v385
        %v463 = vadd.f32 %v452, %v459
        %v464 = vadd.f32 %v453, %v460
        %v465 = vadd.f32 %v454, %v461
        %v466 = vadd.f32 %v455, %v462
        %s467 = sadd.s32 %s396, 7
        %s468 = sld [smem:[#allocation3 + %s467]]
        %v469 = vstv %s468
        %v470 = vmul.f32 %v469, %v392
        %v471 = vmul.f32 %v469, %v393
        %v472 = vmul.f32 %v469, %v394
        %v473 = vmul.f32 %v469, %v395
        %v474 = vadd.f32 %v463, %v470
        %v475 = vadd.f32 %v464, %v471
        %v476 = vadd.f32 %v465, %v472
        %v477 = vadd.f32 %v466, %v473
        %s478 = scalar_lea.vmem %s297, 32 [#allocation7]
        %v479 = vld [vmem:[%s478] sm:$0xff]
        %v480 = vld [vmem:[%s478 + $0x8] sm:$0xff]
        %v481 = vld [vmem:[%s478 + $0x10] sm:$0xff]
        %v482 = vld [vmem:[%s478 + $0x18] sm:$0xff]
        %v483 = vadd.f32 %v479, %v474
        %v484 = vadd.f32 %v480, %v475
        %v485 = vadd.f32 %v481, %v476
        %v486 = vadd.f32 %v482, %v477
        %s487 = scalar_lea.vmem %s307, 32 [#allocation8]
        %v488 = vld [vmem:[%s487] sm:$0xff]
        %v489 = vld [vmem:[%s487 + $0x8] sm:$0xff]
        %v490 = vld [vmem:[%s487 + $0x10] sm:$0xff]
        %v491 = vld [vmem:[%s487 + $0x18] sm:$0xff]
        %v492 = vsub.f32 %v483, %v488
        %v493 = vsub.f32 %v484, %v489
        %v494 = vsub.f32 %v485, %v490
        %v495 = vsub.f32 %v486, %v491
        %v496 = vmul.f32 %v492, %v492
        %v497 = vmul.f32 %v493, %v493
        %v498 = vmul.f32 %v494, %v494
        %v499 = vmul.f32 %v495, %v495
        %v500 = vadd.f32 %v445, %v496
        %v501 = vadd.f32 %v446, %v497
        %v502 = vadd.f32 %v447, %v498
        %v503 = vadd.f32 %v448, %v499
        %s504 = sadd.s32 %s396, 2
        %s505 = sld [smem:[#allocation3 + %s504]]
        %v506 = vstv %s505
        %v507 = vmul.f32 %v506, %v372
        %v508 = vmul.f32 %v506, %v373
        %v509 = vmul.f32 %v506, %v374
        %v510 = vmul.f32 %v506, %v375
        %s511 = sadd.s32 %s396, 5
        %s512 = sld [smem:[#allocation3 + %s511]]
        %v513 = vstv %s512
        %v514 = vmul.f32 %v513, %v382
        %v515 = vmul.f32 %v513, %v383
        %v516 = vmul.f32 %v513, %v384
        %v517 = vmul.f32 %v513, %v385
        %v518 = vadd.f32 %v507, %v514
        %v519 = vadd.f32 %v508, %v515
        %v520 = vadd.f32 %v509, %v516
        %v521 = vadd.f32 %v510, %v517
        %s522 = sadd.s32 %s396, 8
        %s523 = sld [smem:[#allocation3 + %s522]]
        %v524 = vstv %s523
        %v525 = vmul.f32 %v524, %v392
        %v526 = vmul.f32 %v524, %v393
        %v527 = vmul.f32 %v524, %v394
        %v528 = vmul.f32 %v524, %v395
        %v529 = vadd.f32 %v518, %v525
        %v530 = vadd.f32 %v519, %v526
        %v531 = vadd.f32 %v520, %v527
        %v532 = vadd.f32 %v521, %v528
        %s533 = scalar_lea.vmem %s297, 64 [#allocation7]
        %v534 = vld [vmem:[%s533] sm:$0xff]
        %v535 = vld [vmem:[%s533 + $0x8] sm:$0xff]
        %v536 = vld [vmem:[%s533 + $0x10] sm:$0xff]
        %v537 = vld [vmem:[%s533 + $0x18] sm:$0xff]
        %v538 = vadd.f32 %v534, %v529
        %v539 = vadd.f32 %v535, %v530
        %v540 = vadd.f32 %v536, %v531
        %v541 = vadd.f32 %v537, %v532
        %s542 = scalar_lea.vmem %s307, 64 [#allocation8]
        %v543 = vld [vmem:[%s542] sm:$0xff]
        %v544 = vld [vmem:[%s542 + $0x8] sm:$0xff]
        %v545 = vld [vmem:[%s542 + $0x10] sm:$0xff]
        %v546 = vld [vmem:[%s542 + $0x18] sm:$0xff]
        %v547 = vsub.f32 %v538, %v543
        %v548 = vsub.f32 %v539, %v544
        %v549 = vsub.f32 %v540, %v545
        %v550 = vsub.f32 %v541, %v546
        %v551 = vmul.f32 %v547, %v547
        %v552 = vmul.f32 %v548, %v548
        %v553 = vmul.f32 %v549, %v549
        %v554 = vmul.f32 %v550, %v550
        %v555 = vadd.f32 %v500, %v551
        %v556 = vadd.f32 %v501, %v552
        %v557 = vadd.f32 %v502, %v553
        %v558 = vadd.f32 %v503, %v554
        %vm559 = vcmp.ge.f32.partialorder %v555, 0.01
        %vm560 = vcmp.ge.f32.partialorder %v556, 0.01
        %vm561 = vcmp.ge.f32.partialorder %v557, 0.01
        %vm562 = vcmp.ge.f32.partialorder %v558, 0.01
        %vm563 = vcmp.le.f32.partialorder %v555, 4.0
        %vm564 = vcmp.le.f32.partialorder %v556, 4.0
        %vm565 = vcmp.le.f32.partialorder %v557, 4.0
        %vm566 = vcmp.le.f32.partialorder %v558, 4.0
        %vm567 = vmand %vm559, %vm563
        %vm568 = vmand %vm560, %vm564
        %vm569 = vmand %vm561, %vm565
        %vm570 = vmand %vm562, %vm566
        %v571 = vsel %vm567, %v555, 1.0
        %v572 = vsel %vm568, %v556, 1.0
        %v573 = vsel %vm569, %v557, 1.0
        %v574 = vsel %vm570, %v558, 1.0
        %v575 = vrcp.pop %v571
        %v576 = vmul.f32 %v571, %v575
        %v577 = vsub.f32 1.0, %v576
        %v578 = vmul.f32 %v575, %v577
        %v579 = vadd.f32 %v575, %v578
        %vm580 = vweird.f32 %v571
        %vm581 = vweird.f32 %v575
        %vm582 = vmor %vm580, %vm581
        %v583 = vsel %vm582, %v575, %v579
        %v584 = vand.u32 2147483647, %v571
        %vm585 = vcmp.eq.f32.partialorder %v584, 8.507059e+37
        %v586 = vand.u32 %v571, 2147483648
        %v587 = vor.u32 1.1754944e-38, %v586
        %v588 = vsel %vm585, %v587, %v583
        %v589 = vrcp.pop %v572
        %v590 = vmul.f32 %v572, %v589
        %v591 = vsub.f32 1.0, %v590
        %v592 = vmul.f32 %v589, %v591
        %v593 = vadd.f32 %v589, %v592
        %vm594 = vweird.f32 %v572
        %vm595 = vweird.f32 %v589
        %vm596 = vmor %vm594, %vm595
        %v597 = vsel %vm596, %v589, %v593
        %v598 = vand.u32 2147483647, %v572
        %vm599 = vcmp.eq.f32.partialorder %v598, 8.507059e+37
        %v600 = vand.u32 %v572, 2147483648
        %v601 = vor.u32 1.1754944e-38, %v600
        %v602 = vsel %vm599, %v601, %v597
        %v603 = vrcp.pop %v573
        %v604 = vmul.f32 %v573, %v603
        %v605 = vsub.f32 1.0, %v604
        %v606 = vmul.f32 %v603, %v605
        %v607 = vadd.f32 %v603, %v606
        %vm608 = vweird.f32 %v573
        %vm609 = vweird.f32 %v603
        %vm610 = vmor %vm608, %vm609
        %v611 = vsel %vm610, %v603, %v607
        %v612 = vand.u32 2147483647, %v573
        %vm613 = vcmp.eq.f32.partialorder %v612, 8.507059e+37
        %v614 = vand.u32 %v573, 2147483648
        %v615 = vor.u32 1.1754944e-38, %v614
        %v616 = vsel %vm613, %v615, %v611
        %v617 = vrcp.pop %v574
        %v618 = vmul.f32 %v574, %v617
        %v619 = vsub.f32 1.0, %v618
        %v620 = vmul.f32 %v617, %v619
        %v621 = vadd.f32 %v617, %v620
        %vm622 = vweird.f32 %v574
        %vm623 = vweird.f32 %v617
        %vm624 = vmor %vm622, %vm623
        %v625 = vsel %vm624, %v617, %v621
        %v626 = vand.u32 2147483647, %v574
        %vm627 = vcmp.eq.f32.partialorder %v626, 8.507059e+37
        %v628 = vand.u32 %v574, 2147483648
        %v629 = vor.u32 1.1754944e-38, %v628
        %v630 = vsel %vm627, %v629, %v625
        %v631 = vld [vmem:[#allocation2] sm:$0xff]
        %v632 = vld [vmem:[#allocation2 + $0x8] sm:$0xff]
        %v633 = vld [vmem:[#allocation2 + $0x10] sm:$0xff]
        %v634 = vld [vmem:[#allocation2 + $0x18] sm:$0xff]
        %v635 = vsel %vm567, %v588, 0.0
        %v636 = vsel %vm568, %v602, 0.0
        %v637 = vsel %vm569, %v616, 0.0
        %v638 = vsel %vm570, %v630, 0.0
        %v639 = vadd.f32 %v631, %v635
        %v640 = vadd.f32 %v632, %v636
        %v641 = vadd.f32 %v633, %v637
        %v642 = vadd.f32 %v634, %v638
        %643 = vst [vmem:[#allocation2] sm:$0xff] %v639
        %644 = vst [vmem:[#allocation2 + $0x8] sm:$0xff] %v640
        %645 = vst [vmem:[#allocation2 + $0x10] sm:$0xff] %v641
        %646 = vst [vmem:[#allocation2 + $0x18] sm:$0xff] %v642
        // Predicated region
        $region57: #{tpu_custom_call.1} parent=35 // pred_check
          %p647 = pneg %p359
        $region58: #{tpu_custom_call.1} parent=35 // pred_check_branch
          %649 = sbr.rel (%p647) target = $region60
        $region59: #{tpu_custom_call.1} parent=35 // pred_region
          %v650 = vld [vmem:[#allocation2] sm:$0xff]
          %v651 = vld [vmem:[#allocation2 + $0x8] sm:$0xff]
          %v652 = vld [vmem:[#allocation2 + $0x10] sm:$0xff]
          %v653 = vld [vmem:[#allocation2 + $0x18] sm:$0xff]
          %v654 = vadd.f32 %v650, %v651
          %v655 = vadd.f32 %v654, %v652
          %v656 = vadd.f32 %v655, %v653
          %657 = vadd.xlane.f32.xlu0 %v656
          %v658 = vpop.xlane.xlu0 %657
          %v659 = vrot.slane %v658, 4
          %v660 = vadd.f32 %v658, %v659
          %v661 = vrot.slane %v660, 2
          %v662 = vadd.f32 %v660, %v661
          %v663 = vrot.slane %v662, 1
          %v664 = vadd.f32 %v662, %v663
          %s665 = vtos %v664
          %s666 = smul.f32 %s665, 0.5
          %v667 = vstv %s666
          %668 = vst [vmem:[%s353] sm:$0xff] %v667
        $region60: #{tpu_custom_call.1} parent=35 // pred_fallthru
          _
        %s669 = sand.u32 %s165, 1
        %s670 = scalar_lea.sflag [#allocation5], %s669
        %s671 = sand.u32 %s165, 1
        %s672 = smul.addr %s671, 8
        %s673 = scalar_lea.vmem [#allocation11], %s672
        // Predicated region
        $region61: #{tpu_custom_call.1} parent=35 // pred_check
          %p674 = pneg %p175
        $region62: #{tpu_custom_call.1} parent=35 // pred_check_branch
          %676 = sbr.rel (%p674) target = $region64
        $region63: #{tpu_custom_call.1} parent=35 // pred_region
          %678 = vsyncadd %s670, 0
          %s679 = sadd.s32 %s31, %s30
          %s680 = smul.addr %s679, 8
          %s681 = scalar_lea.hbm %s4, %s680
          %s683 = sshll.u32 %s673, 4
          %s684 = int_to_ptr.vmem [resolvable:$true] %s683
          %s685 = sshll.u32 %s681, 4
          %s686 = int_to_ptr.hbm [resolvable:$true] %s685
          %688 = dma.vmem_to_hbm [thread:$0]  %s684, 128, %s686, %s670
        $region64: #{tpu_custom_call.1} parent=35 // pred_fallthru
          _
      $region36: #{tpu_custom_call.1} parent=5 // pred_fallthru
        _
      %p689 = scmp.le.s32.totalorder 2, %s20
      // Predicated region
      $region65: #{tpu_custom_call.1} parent=5 // pred_check
        %p690 = pneg %p689
      $region66: #{tpu_custom_call.1} parent=5 // pred_check_branch
        %692 = sbr.rel (%p690) target = $region68
      $region67: #{tpu_custom_call.1} parent=5 // pred_region
        %s693 = ssub.s32 %s20, 2
        // Predicated region
        $region69: #{tpu_custom_call.1} parent=67 // pred_check
          %p694 = pneg %p181
        $region70: #{tpu_custom_call.1} parent=67 // pred_check_branch
          %696 = sbr.rel (%p694) target = $region72
        $region71: #{tpu_custom_call.1} parent=67 // pred_region
          %s697 = sand.u32 %s166, 1
          %s698 = scalar_lea.sflag [#allocation5], %s697
          %s699 = sand.u32 %s166, 1
          %s700 = smul.addr %s699, 8
          %s701 = scalar_lea.vmem [#allocation11], %s700
          %703 = dma.done %s698, 128
        $region72: #{tpu_custom_call.1} parent=67 // pred_fallthru
          _
      $region68: #{tpu_custom_call.1} parent=5 // pred_fallthru
        _
    $region6: #{tpu_custom_call.1} parent=1 // loop_footer
      %s24 = sadd.s32 1, %s20
    $region7: #{tpu_custom_call.1} parent=1 // loop_footer_branch
      %19 = sbr.rel target = $region3
    $region8: #{tpu_custom_call.1} parent=1 // loop_exit
      _
    %704 = vsyncpa [#allocation4], 1
    %s705 = scalar_lea.sflag [#allocation4], 1
    %706 = vsyncpa %s705, 1
    %707 = vsyncpa [#allocation9], 1
    %s708 = scalar_lea.sflag [#allocation9], 1
    %709 = vsyncpa %s708, 1
    %710 = vsyncpa [#allocation5], 1
    %s711 = scalar_lea.sflag [#allocation5], 1
    %712 = vsyncpa %s711, 1
    %713 = vsyncpa [#allocation6], 1
    %s714 = scalar_lea.sflag [#allocation6], 1
    %715 = vsyncpa %s714, 1

</llo_original>
